<compile_context>
chip_gen: v7x
topology: tpu7x:2x2x1
jax: 0.10.0
libtpu: 0.0.40
codegen_flags: <defaults>
</compile_context>

<pallas_src>
import functools

import jax
import jax.numpy as jnp
from jax.experimental import pallas as pl
from jax.experimental.pallas import tpu as pltpu


# ------------------------------ Pallas kernel -------------------------------

def _scse_kernel(x_ref, w1t_ref, b1_ref, w2t_ref, b2_ref, wc_ref, bc_ref,
                 o_ref, *, inv_hw):
    # x_ref block: (Nb, C, HWp).  Weights are small whole-array VMEM refs,
    # the conv bias scalar lives in SMEM.
    x = x_ref[...].astype(jnp.float32)                         # (Nb, C, HWp)

    # ---- channel-SE (GAP over pixels -> linear -> relu -> linear -> sigmoid)
    # Padded pixel columns are zero, so sum * (1/HW_true) == true mean.
    m = jnp.sum(x, axis=2) * inv_hw                            # (Nb, C) lane reduce
    z = jnp.maximum(
        jnp.dot(m, w1t_ref[...], preferred_element_type=jnp.float32)
        + b1_ref[...], 0.0)                                    # (Nb, Cr)
    s = jax.nn.sigmoid(
        jnp.dot(z, w2t_ref[...], preferred_element_type=jnp.float32)
        + b2_ref[...])                                         # (Nb, C)

    # ---- spatial-SE (1x1 conv C->1 -> sigmoid): VPU multiply + sublane
    # reduce; an M=1 MXU matmul would waste a full systolic pass.
    wc = wc_ref[...][:, :, None]                               # (1, C, 1)
    lin = jnp.sum(x * wc, axis=1, keepdims=True) + bc_ref[0]   # (Nb, 1, HWp)
    g = jax.nn.sigmoid(lin)

    # spatial_gate(x) + channel_gate(x) = x*s + x*g = x*(s + g)  (pure VPU;
    # s broadcasts along lanes, g along sublanes).
    o_ref[...] = (x * (s[:, :, None] + g)).astype(o_ref.dtype)


# ------------------------------ wrapper --------------------------------------

def scse_forward(x_nchw, params, *, block_budget_bytes=6 * 1024 * 1024):
    n, c, h, w = x_nchw.shape
    hw = h * w
    hwp = ((hw + 127) // 128) * 128            # lane-dense last dim
    cr = params['w1'].shape[0]
    itemsize = jnp.dtype(x_nchw.dtype).itemsize

    x3 = x_nchw.reshape(n, c, hw)
    if hwp != hw:
        x3 = jnp.pad(x3, ((0, 0), (0, 0), (0, hwp - hw)))

    # ---- pick the batch block size Nb (biggest divisor of N under budget,
    # but keep >=2 grid steps so v7x's two TensorCores both get work). ----
    per_sample = c * hwp * itemsize
    nb_cap = max(1, block_budget_bytes // per_sample)
    if n >= 2:
        nb_cap = min(nb_cap, n // 2)
    nb = 1
    for d in range(1, n + 1):
        if n % d == 0 and d <= nb_cap:
            nb = d
    grid = (n // nb,)

    # Kernel-layout weights (transposed once in the wrapper; tiny).
    w1t = params['w1'].T                       # (C, Cr)
    b1r = params['b1'].reshape(1, cr)
    w2t = params['w2'].T                       # (Cr, C)
    b2r = params['b2'].reshape(1, c)
    wc = params['wc'].reshape(1, c)            # Conv2d(C,1,1) weight
    bc = params['bc'].reshape(1)               # Conv2d bias scalar

    def full(shape):
        ndim = len(shape)
        return pl.BlockSpec(shape, lambda i, _nd=ndim: (0,) * _nd)

    kernel = functools.partial(_scse_kernel, inv_hw=1.0 / hw)

    out = pl.pallas_call(
        kernel,
        out_shape=jax.ShapeDtypeStruct((n, c, hwp), x_nchw.dtype),
        grid_spec=pltpu.PrefetchScalarGridSpec(
            num_scalar_prefetch=0,
            grid=grid,
            in_specs=[
                pl.BlockSpec((nb, c, hwp), lambda i: (i, 0, 0)),     # x slab
                full((c, cr)),                                       # w1^T
                full((1, cr)),                                       # b1
                full((cr, c)),                                       # w2^T
                full((1, c)),                                        # b2
                full((1, c)),                                        # wc
                pl.BlockSpec(memory_space=pltpu.MemorySpace.SMEM),   # bc
            ],
            out_specs=pl.BlockSpec((nb, c, hwp), lambda i: (i, 0, 0)),
        ),
        compiler_params=pltpu.CompilerParams(
            dimension_semantics=("parallel",),
            vmem_limit_bytes=32 * 1024 * 1024,
        ),
    )(x3, w1t, b1r, w2t, b2r, wc, bc)

    return out[:, :, :hw].reshape(n, c, h, w)


# ------------------------------ parameters -----------------------------------

def init_params(key, c, r=16):
    cr = max(c // r, 1)
    ks = jax.random.split(key, 6)

    def u(k, shape, fan_in):
        b = 1.0 / jnp.sqrt(fan_in)
        return jax.random.uniform(k, shape, jnp.float32, -b, b)

    return {
        # nn.Linear(c, cr)
        'w1': u(ks[0], (cr, c), c), 'b1': u(ks[1], (cr,), c),
        # nn.Linear(cr, c)
        'w2': u(ks[2], (c, cr), cr), 'b2': u(ks[3], (c,), cr),
        # nn.Conv2d(c, 1, kernel_size=1)
        'wc': u(ks[4], (1, c, 1, 1), c), 'bc': u(ks[5], (1,), c),
    }


# ------------------------------ pure-JAX reference ---------------------------

def scse_reference(x, p):
    n, c, h, w = x.shape
    m = x.reshape(n, c, h * w).mean(-1)                      # (N, C)
    z = jax.nn.relu(m @ p['w1'].T + p['b1'])                 # (N, Cr)
    s = jax.nn.sigmoid(z @ p['w2'].T + p['b2'])              # (N, C)
    g1 = x * s[:, :, None, None]                             # SpatialGate2d
    lin = jnp.einsum('nchw,c->nhw', x, p['wc'][0, :, 0, 0]) + p['bc'][0]
    g2 = x * jax.nn.sigmoid(lin)[:, None, :, :]              # ChannelGate2d
    return g1 + g2


# ------------------------------ main ------------------------------------------

if __name__ == "__main__":
    root = jax.random.PRNGKey(0)
    kx1, kx2, kp = jax.random.split(root, 3)

    fwd = jax.jit(scse_forward)

    # Case 1: HW already a multiple of 128 (lane-dense directly).
    N, C, H, W = 2, 32, 16, 16            # in_ch=32 -> squeeze width 32//16 = 2
    params = init_params(kp, C)
    x = jax.random.normal(kx1, (N, C, H, W), jnp.float32)
    out = fwd(x, params)
    jax.block_until_ready(out)
    ref = scse_reference(x, params)
    assert out.shape == (N, C, H, W), out.shape
    assert jnp.allclose(out, ref, atol=1e-4, rtol=1e-4), \
        float(jnp.max(jnp.abs(out - ref)))

    # Case 2: non-128-multiple HW (exercises the lane-padding path).
    N2, H2, W2 = 3, 14, 14
    x2 = jax.random.normal(kx2, (N2, C, H2, W2), jnp.float32)
    out2 = fwd(x2, params)
    jax.block_until_ready(out2)
    ref2 = scse_reference(x2, params)
    assert out2.shape == (N2, C, H2, W2), out2.shape
    assert jnp.allclose(out2, ref2, atol=1e-4, rtol=1e-4), \
        float(jnp.max(jnp.abs(out2 - ref2)))

    print("KERNEL_OK")
</pallas_src>

<mosaic_0001>
module attributes {stable_mosaic.version = 11 : i64} {
  func.func @_scse_kernel(%arg0: i32, %arg1: memref<1x32x256xf32, #tpu.memory_space<vmem>>, %arg2: memref<32x2xf32, #tpu.memory_space<vmem>>, %arg3: memref<1x2xf32, #tpu.memory_space<vmem>>, %arg4: memref<2x32xf32, #tpu.memory_space<vmem>>, %arg5: memref<1x32xf32, #tpu.memory_space<vmem>>, %arg6: memref<1x32xf32, #tpu.memory_space<vmem>>, %arg7: memref<1xf32, #tpu.memory_space<smem>>, %arg8: memref<1x32x256xf32, #tpu.memory_space<vmem>>) attributes {dimension_semantics = [#tpu.dimension_semantics<parallel>], iteration_bounds = array<i64: 2>, scalar_prefetch = 0 : i64, scratch_operands = 0 : i64, tpu.core_type = #tpu.core_type<tc>, window_params = [{transform_indices = @transform_0, window_bounds = array<i64: 1, 32, 256>}, {pipeline_mode = #tpu.pipeline_mode<synchronous>, transform_indices = @transform_1, window_bounds = array<i64: 32, 2>}, {pipeline_mode = #tpu.pipeline_mode<synchronous>, transform_indices = @transform_2, window_bounds = array<i64: 1, 2>}, {pipeline_mode = #tpu.pipeline_mode<synchronous>, transform_indices = @transform_3, window_bounds = array<i64: 2, 32>}, {pipeline_mode = #tpu.pipeline_mode<synchronous>, transform_indices = @transform_4, window_bounds = array<i64: 1, 32>}, {pipeline_mode = #tpu.pipeline_mode<synchronous>, transform_indices = @transform_5, window_bounds = array<i64: 1, 32>}, {transform_indices = @transform_6, window_bounds = array<i64: 1>}, {transform_indices = @transform_7, window_bounds = array<i64: 1, 32, 256>}]} {
    %c0 = arith.constant 0 : index
    %c0_0 = arith.constant 0 : index
    %c0_1 = arith.constant 0 : index
    %0 = vector.load %arg1[%c0, %c0_0, %c0_1] : memref<1x32x256xf32, #tpu.memory_space<vmem>>, vector<1x32x256xf32>
    %cst = arith.constant dense<0.000000e+00> : vector<1x32xf32>
    %1 = vector.multi_reduction <add>, %0, %cst [2] : vector<1x32x256xf32> to vector<1x32xf32>
    %cst_2 = arith.constant 3.906250e-03 : f32
    %2 = vector.broadcast %cst_2 : f32 to vector<1x32xf32>
    %3 = arith.mulf %1, %2 : vector<1x32xf32>
    %c0_3 = arith.constant 0 : index
    %c0_4 = arith.constant 0 : index
    %4 = vector.load %arg2[%c0_3, %c0_4] : memref<32x2xf32, #tpu.memory_space<vmem>>, vector<32x2xf32>
    %cst_5 = arith.constant dense<0.000000e+00> : vector<1x2xf32>
    %5 = tpu.matmul %3, %4, %cst_5 {dimension_numbers = #tpu.dot_dimension_numbers<[1], [0], [0], [1], [0, 0, 1, 1], [], []>} : vector<1x32xf32>, vector<32x2xf32>, vector<1x2xf32> -> vector<1x2xf32>
    %c0_6 = arith.constant 0 : index
    %c0_7 = arith.constant 0 : index
    %6 = vector.load %arg3[%c0_6, %c0_7] : memref<1x2xf32, #tpu.memory_space<vmem>>, vector<1x2xf32>
    %7 = arith.addf %5, %6 : vector<1x2xf32>
    %cst_8 = arith.constant 0.000000e+00 : f32
    %8 = vector.broadcast %cst_8 : f32 to vector<1x2xf32>
    %9 = arith.maximumf %7, %8 : vector<1x2xf32>
    %c0_9 = arith.constant 0 : index
    %c0_10 = arith.constant 0 : index
    %10 = vector.load %arg4[%c0_9, %c0_10] : memref<2x32xf32, #tpu.memory_space<vmem>>, vector<2x32xf32>
    %cst_11 = arith.constant dense<0.000000e+00> : vector<1x32xf32>
    %11 = tpu.matmul %9, %10, %cst_11 {dimension_numbers = #tpu.dot_dimension_numbers<[1], [0], [0], [1], [0, 0, 1, 1], [], []>} : vector<1x2xf32>, vector<2x32xf32>, vector<1x32xf32> -> vector<1x32xf32>
    %c0_12 = arith.constant 0 : index
    %c0_13 = arith.constant 0 : index
    %12 = vector.load %arg5[%c0_12, %c0_13] : memref<1x32xf32, #tpu.memory_space<vmem>>, vector<1x32xf32>
    %13 = arith.addf %11, %12 : vector<1x32xf32>
    %14 = arith.negf %13 : vector<1x32xf32>
    %15 = math.exp %14 : vector<1x32xf32>
    %cst_14 = arith.constant 1.000000e+00 : f32
    %16 = vector.broadcast %cst_14 : f32 to vector<1x32xf32>
    %17 = arith.addf %16, %15 : vector<1x32xf32>
    %18 = arith.divf %16, %17 : vector<1x32xf32>
    %c0_15 = arith.constant 0 : index
    %c0_16 = arith.constant 0 : index
    %19 = vector.load %arg6[%c0_15, %c0_16] : memref<1x32xf32, #tpu.memory_space<vmem>>, vector<1x32xf32>
    %20 = vector.shape_cast %19 : vector<1x32xf32> to vector<1x32x1xf32>
    %21 = vector.broadcast %20 : vector<1x32x1xf32> to vector<1x32x256xf32>
    %22 = arith.mulf %0, %21 : vector<1x32x256xf32>
    %cst_17 = arith.constant dense<0.000000e+00> : vector<1x256xf32>
    %23 = vector.multi_reduction <add>, %22, %cst_17 [1] : vector<1x32x256xf32> to vector<1x256xf32>
    %24 = vector.shape_cast %23 : vector<1x256xf32> to vector<1x1x256xf32>
    %c0_18 = arith.constant 0 : index
    %25 = memref.load %arg7[%c0_18] : memref<1xf32, #tpu.memory_space<smem>>
    %26 = vector.broadcast %25 : f32 to vector<1x1x256xf32>
    %27 = arith.addf %24, %26 : vector<1x1x256xf32>
    %28 = arith.negf %27 : vector<1x1x256xf32>
    %29 = math.exp %28 : vector<1x1x256xf32>
    %cst_19 = arith.constant 1.000000e+00 : f32
    %30 = vector.broadcast %cst_19 : f32 to vector<1x1x256xf32>
    %31 = arith.addf %30, %29 : vector<1x1x256xf32>
    %32 = arith.divf %30, %31 : vector<1x1x256xf32>
    %33 = vector.shape_cast %18 : vector<1x32xf32> to vector<1x32x1xf32>
    %34 = vector.broadcast %33 : vector<1x32x1xf32> to vector<1x32x256xf32>
    %35 = vector.broadcast %32 : vector<1x1x256xf32> to vector<1x32x256xf32>
    %36 = arith.addf %34, %35 : vector<1x32x256xf32>
    %37 = arith.mulf %0, %36 : vector<1x32x256xf32>
    %c0_20 = arith.constant 0 : index
    %c0_21 = arith.constant 0 : index
    %c0_22 = arith.constant 0 : index
    %38 = vector.load %arg8[%c0_20, %c0_21, %c0_22] : memref<1x32x256xf32, #tpu.memory_space<vmem>>, vector<1x32x256xf32>
    tpu.vector_store %arg8[%c0_20, %c0_21, %c0_22], %37 {strides = array<i32>} : memref<1x32x256xf32, #tpu.memory_space<vmem>>, vector<1x32x256xf32>,
    return
  }
  func.func @transform_0(%arg0: i32) -> (i32, i32, i32) {
    %c0_i32 = arith.constant 0 : i32
    %c0_i32_0 = arith.constant 0 : i32
    %c0_i32_1 = arith.constant 0 : i32
    return %arg0, %c0_i32, %c0_i32_0 : i32, i32, i32
  }
  func.func @transform_1(%arg0: i32) -> (i32, i32) {
    %c0_i32 = arith.constant 0 : i32
    %c0_i32_0 = arith.constant 0 : i32
    %c0_i32_1 = arith.constant 0 : i32
    return %c0_i32, %c0_i32_0 : i32, i32
  }
  func.func @transform_2(%arg0: i32) -> (i32, i32) {
    %c0_i32 = arith.constant 0 : i32
    %c0_i32_0 = arith.constant 0 : i32
    %c0_i32_1 = arith.constant 0 : i32
    return %c0_i32, %c0_i32_0 : i32, i32
  }
  func.func @transform_3(%arg0: i32) -> (i32, i32) {
    %c0_i32 = arith.constant 0 : i32
    %c0_i32_0 = arith.constant 0 : i32
    %c0_i32_1 = arith.constant 0 : i32
    return %c0_i32, %c0_i32_0 : i32, i32
  }
  func.func @transform_4(%arg0: i32) -> (i32, i32) {
    %c0_i32 = arith.constant 0 : i32
    %c0_i32_0 = arith.constant 0 : i32
    %c0_i32_1 = arith.constant 0 : i32
    return %c0_i32, %c0_i32_0 : i32, i32
  }
  func.func @transform_5(%arg0: i32) -> (i32, i32) {
    %c0_i32 = arith.constant 0 : i32
    %c0_i32_0 = arith.constant 0 : i32
    %c0_i32_1 = arith.constant 0 : i32
    return %c0_i32, %c0_i32_0 : i32, i32
  }
  func.func @transform_6(%arg0: i32) -> i32 {
    %c0_i32 = arith.constant 0 : i32
    %c0_i32_0 = arith.constant 0 : i32
    return %c0_i32 : i32
  }
  func.func @transform_7(%arg0: i32) -> (i32, i32, i32) {
    %c0_i32 = arith.constant 0 : i32
    %c0_i32_0 = arith.constant 0 : i32
    %c0_i32_1 = arith.constant 0 : i32
    return %arg0, %c0_i32, %c0_i32_0 : i32, i32, i32
  }
}

</mosaic_0001>

<llo_original>
// kernel: scse_forward.1
$region0: #{scse_forward.1}
  #allocation0 [shape = 'u32[]', space=smem, size = 0x4, offset = 0x4, fixed_abs, tag = 'smem constant byte address 0x4 - core index']
  #allocation1 [shape = 'u32[144,128]{1,0:T(1,128)}', space=vmem, size = 0x12000, scoped, tag = 'internal scratch']
  #allocation2 [shape = 'f32[1]{0:T(128)S(6)}', space=smem, size = 0x200, scoped, tag = 'scoped memory for scse_forward.1']
  %s0 = inlined_call_operand.vmem [shape: f32[2,32,256], index: 0, kind: input, shape index: {}]
  %s1 = inlined_call_operand.vmem [shape: f32[32,2], index: 1, kind: input, shape index: {}]
  %s2 = inlined_call_operand.vmem [shape: f32[1,2], index: 2, kind: input, shape index: {}]
  %s3 = inlined_call_operand.vmem [shape: f32[2,32], index: 3, kind: input, shape index: {}]
  %s4 = inlined_call_operand.vmem [shape: f32[1,32], index: 4, kind: input, shape index: {}]
  %s5 = inlined_call_operand.vmem [shape: f32[1,32], index: 5, kind: input, shape index: {}]
  %s6 = inlined_call_operand.<no memory space> [shape: f32[1], index: 6, kind: input, shape index: {}]
  %s7 = inlined_call_operand.vmem [shape: f32[2,32,256], index: 7, kind: output, shape index: {}]
  %s8 = sld [smem:[#allocation0]]
  $region61: #{scse_forward.1} parent=0
    _
  %s10 = ssub.s32 1, %s8
  %s11 = scalar_select 0, %s10, %s8
  %12 = sst [smem:[#allocation2]] %s6
  loop: start=0, step=1, limit=4
  $region2: #{scse_forward.1} parent=0 // loop_pre_header
    _
  $region3: #{scse_forward.1} parent=0 // loop_header
    %s14 = sphi 0, %s18
    %p15 = scmp.ge.s32.totalorder %s14, 4
    %s24 = sphi 0, %s26
    %s27 = sphi 0, %s24
    %s28 = sphi 0, %s27
    %s44 = sphi 0, %s28
    %s48 = sphi 0, %s48
    %s50 = sphi 0, %s48
    %s51 = sphi 0, %s50
    %s65 = sphi 0, %s51
    %s69 = sphi 0, %s69
    %s71 = sphi 0, %s69
    %s72 = sphi 0, %s71
    %s86 = sphi 0, %s72
    %s90 = sphi 0, %s90
    %s92 = sphi 0, %s90
    %s93 = sphi 0, %s92
    %s107 = sphi 0, %s93
    %s111 = sphi 0, %s111
    %s113 = sphi 0, %s111
    %s114 = sphi 0, %s113
    %s128 = sphi 0, %s114
    %s132 = sphi 0, %s132
    %s134 = sphi 0, %s132
    %s135 = sphi 0, %s134
    %s149 = sphi 0, %s135
    %s153 = sphi 0, %s153
    %s155 = sphi 0, %s153
    %s156 = sphi 0, %s155
    %s170 = sphi 0, %s156
    %s176 = sphi 0, %s178
    %s179 = sphi 0, %s176
    %s180 = sphi 0, %s179
    %s196 = sphi 0, %s180
  $region4: #{scse_forward.1} parent=0 // loop_header_branch
    %17 = sbr.rel (%p15) target = $region8
  $region5: #{scse_forward.1} parent=0 // loop_body
    %s19 = ssub.s32 %s14, 1
    %s20 = ssub.s32 %s14, 2
    %s21 = sadd.s32 %s14, 1
    %s22 = ssub.s32 %s14, %s21
    %p23 = scmp.eq.s32.totalorder %s22, 0
    %s25 = sadd.s32 %s24, 1
    %s26 = scalar_select %p23, %s24, %s25
    %p29 = pneg %p23
    %p30 = scmp.eq.s32.totalorder %s14, 1
    %p31 = por %p29, %p30
    %p32 = scmp.ne.s32.totalorder %s24, %s27
    %p33 = scmp.eq.s32.totalorder %s14, 0
    %p34 = por %p32, %p33
    %p35 = scmp.ne.s32.totalorder %s24, %s27
    %p36 = scmp.eq.s32.totalorder %s19, 1
    %p37 = por %p35, %p36
    %p38 = scmp.ne.s32.totalorder %s27, %s28
    %p39 = scmp.eq.s32.totalorder %s19, 0
    %p40 = por %p38, %p39
    %p41 = scmp.ne.s32.totalorder %s27, %s28
    %p42 = scmp.eq.s32.totalorder %s20, 1
    %p43 = por %p41, %p42
    %p45 = scmp.ne.s32.totalorder %s28, %s44
    %p46 = scmp.eq.s32.totalorder %s20, 0
    %p47 = por %p45, %p46
    %s49 = sadd.s32 %s48, 1
    %p52 = scmp.eq.s32.totalorder %s14, 1
    %p53 = scmp.ne.s32.totalorder %s48, %s50
    %p54 = scmp.eq.s32.totalorder %s14, 0
    %p55 = por %p53, %p54
    %p56 = scmp.ne.s32.totalorder %s48, %s50
    %p57 = scmp.eq.s32.totalorder %s19, 1
    %p58 = por %p56, %p57
    %p59 = scmp.ne.s32.totalorder %s50, %s51
    %p60 = scmp.eq.s32.totalorder %s19, 0
    %p61 = por %p59, %p60
    %p62 = scmp.ne.s32.totalorder %s50, %s51
    %p63 = scmp.eq.s32.totalorder %s20, 1
    %p64 = por %p62, %p63
    %p66 = scmp.ne.s32.totalorder %s51, %s65
    %p67 = scmp.eq.s32.totalorder %s20, 0
    %p68 = por %p66, %p67
    %s70 = sadd.s32 %s69, 1
    %p73 = scmp.eq.s32.totalorder %s14, 1
    %p74 = scmp.ne.s32.totalorder %s69, %s71
    %p75 = scmp.eq.s32.totalorder %s14, 0
    %p76 = por %p74, %p75
    %p77 = scmp.ne.s32.totalorder %s69, %s71
    %p78 = scmp.eq.s32.totalorder %s19, 1
    %p79 = por %p77, %p78
    %p80 = scmp.ne.s32.totalorder %s71, %s72
    %p81 = scmp.eq.s32.totalorder %s19, 0
    %p82 = por %p80, %p81
    %p83 = scmp.ne.s32.totalorder %s71, %s72
    %p84 = scmp.eq.s32.totalorder %s20, 1
    %p85 = por %p83, %p84
    %p87 = scmp.ne.s32.totalorder %s72, %s86
    %p88 = scmp.eq.s32.totalorder %s20, 0
    %p89 = por %p87, %p88
    %s91 = sadd.s32 %s90, 1
    %p94 = scmp.eq.s32.totalorder %s14, 1
    %p95 = scmp.ne.s32.totalorder %s90, %s92
    %p96 = scmp.eq.s32.totalorder %s14, 0
    %p97 = por %p95, %p96
    %p98 = scmp.ne.s32.totalorder %s90, %s92
    %p99 = scmp.eq.s32.totalorder %s19, 1
    %p100 = por %p98, %p99
    %p101 = scmp.ne.s32.totalorder %s92, %s93
    %p102 = scmp.eq.s32.totalorder %s19, 0
    %p103 = por %p101, %p102
    %p104 = scmp.ne.s32.totalorder %s92, %s93
    %p105 = scmp.eq.s32.totalorder %s20, 1
    %p106 = por %p104, %p105
    %p108 = scmp.ne.s32.totalorder %s93, %s107
    %p109 = scmp.eq.s32.totalorder %s20, 0
    %p110 = por %p108, %p109
    %s112 = sadd.s32 %s111, 1
    %p115 = scmp.eq.s32.totalorder %s14, 1
    %p116 = scmp.ne.s32.totalorder %s111, %s113
    %p117 = scmp.eq.s32.totalorder %s14, 0
    %p118 = por %p116, %p117
    %p119 = scmp.ne.s32.totalorder %s111, %s113
    %p120 = scmp.eq.s32.totalorder %s19, 1
    %p121 = por %p119, %p120
    %p122 = scmp.ne.s32.totalorder %s113, %s114
    %p123 = scmp.eq.s32.totalorder %s19, 0
    %p124 = por %p122, %p123
    %p125 = scmp.ne.s32.totalorder %s113, %s114
    %p126 = scmp.eq.s32.totalorder %s20, 1
    %p127 = por %p125, %p126
    %p129 = scmp.ne.s32.totalorder %s114, %s128
    %p130 = scmp.eq.s32.totalorder %s20, 0
    %p131 = por %p129, %p130
    %s133 = sadd.s32 %s132, 1
    %p136 = scmp.eq.s32.totalorder %s14, 1
    %p137 = scmp.ne.s32.totalorder %s132, %s134
    %p138 = scmp.eq.s32.totalorder %s14, 0
    %p139 = por %p137, %p138
    %p140 = scmp.ne.s32.totalorder %s132, %s134
    %p141 = scmp.eq.s32.totalorder %s19, 1
    %p142 = por %p140, %p141
    %p143 = scmp.ne.s32.totalorder %s134, %s135
    %p144 = scmp.eq.s32.totalorder %s19, 0
    %p145 = por %p143, %p144
    %p146 = scmp.ne.s32.totalorder %s134, %s135
    %p147 = scmp.eq.s32.totalorder %s20, 1
    %p148 = por %p146, %p147
    %p150 = scmp.ne.s32.totalorder %s135, %s149
    %p151 = scmp.eq.s32.totalorder %s20, 0
    %p152 = por %p150, %p151
    %s154 = sadd.s32 %s153, 1
    %p157 = scmp.eq.s32.totalorder %s14, 1
    %p158 = scmp.ne.s32.totalorder %s153, %s155
    %p159 = scmp.eq.s32.totalorder %s14, 0
    %p160 = por %p158, %p159
    %p161 = scmp.ne.s32.totalorder %s153, %s155
    %p162 = scmp.eq.s32.totalorder %s19, 1
    %p163 = por %p161, %p162
    %p164 = scmp.ne.s32.totalorder %s155, %s156
    %p165 = scmp.eq.s32.totalorder %s19, 0
    %p166 = por %p164, %p165
    %p167 = scmp.ne.s32.totalorder %s155, %s156
    %p168 = scmp.eq.s32.totalorder %s20, 1
    %p169 = por %p167, %p168
    %p171 = scmp.ne.s32.totalorder %s156, %s170
    %p172 = scmp.eq.s32.totalorder %s20, 0
    %p173 = por %p171, %p172
    %s174 = ssub.s32 %s14, %s21
    %p175 = scmp.eq.s32.totalorder %s174, 0
    %s177 = sadd.s32 %s176, 1
    %s178 = scalar_select %p175, %s176, %s177
    %p181 = pneg %p175
    %p182 = scmp.eq.s32.totalorder %s14, 1
    %p183 = por %p181, %p182
    %p184 = scmp.ne.s32.totalorder %s176, %s179
    %p185 = scmp.eq.s32.totalorder %s14, 0
    %p186 = por %p184, %p185
    %p187 = scmp.ne.s32.totalorder %s176, %s179
    %p188 = scmp.eq.s32.totalorder %s19, 1
    %p189 = por %p187, %p188
    %p190 = scmp.ne.s32.totalorder %s179, %s180
    %p191 = scmp.eq.s32.totalorder %s19, 0
    %p192 = por %p190, %p191
    %p193 = scmp.ne.s32.totalorder %s179, %s180
    %p194 = scmp.eq.s32.totalorder %s20, 1
    %p195 = por %p193, %p194
    %p197 = scmp.ne.s32.totalorder %s180, %s196
    %p198 = scmp.eq.s32.totalorder %s20, 0
    %p199 = por %p197, %p198
    %p200 = scmp.le.s32.totalorder 1, %s14
    %p201 = scmp.lt.s32.totalorder %s14, 3
    %p202 = pnand %p200, %p201
    %p203 = pneg %p202
    // Predicated region
    $region9: #{scse_forward.1} parent=5 // pred_check
      _
    $region10: #{scse_forward.1} parent=5 // pred_check_branch
      %205 = sbr.rel (%p202) target = $region12
    $region11: #{scse_forward.1} parent=5 // pred_region
      %s206 = ssub.s32 %s14, 1
      // Predicated region
      $region13: #{scse_forward.1} parent=11 // pred_check
        %p207 = pneg %p61
      $region14: #{scse_forward.1} parent=11 // pred_check_branch
        %209 = sbr.rel (%p207) target = $region16
      $region15: #{scse_forward.1} parent=11 // pred_region
        _
      $region16: #{scse_forward.1} parent=11 // pred_fallthru
        _
      // Predicated region
      $region17: #{scse_forward.1} parent=11 // pred_check
        %p210 = pneg %p82
      $region18: #{scse_forward.1} parent=11 // pred_check_branch
        %212 = sbr.rel (%p210) target = $region20
      $region19: #{scse_forward.1} parent=11 // pred_region
        _
      $region20: #{scse_forward.1} parent=11 // pred_fallthru
        _
      // Predicated region
      $region21: #{scse_forward.1} parent=11 // pred_check
        %p213 = pneg %p103
      $region22: #{scse_forward.1} parent=11 // pred_check_branch
        %215 = sbr.rel (%p213) target = $region24
      $region23: #{scse_forward.1} parent=11 // pred_region
        _
      $region24: #{scse_forward.1} parent=11 // pred_fallthru
        _
      // Predicated region
      $region25: #{scse_forward.1} parent=11 // pred_check
        %p216 = pneg %p124
      $region26: #{scse_forward.1} parent=11 // pred_check_branch
        %218 = sbr.rel (%p216) target = $region28
      $region27: #{scse_forward.1} parent=11 // pred_region
        _
      $region28: #{scse_forward.1} parent=11 // pred_fallthru
        _
      // Predicated region
      $region29: #{scse_forward.1} parent=11 // pred_check
        %p219 = pneg %p145
      $region30: #{scse_forward.1} parent=11 // pred_check_branch
        %221 = sbr.rel (%p219) target = $region32
      $region31: #{scse_forward.1} parent=11 // pred_region
        _
      $region32: #{scse_forward.1} parent=11 // pred_fallthru
        _
      // Predicated region
      $region33: #{scse_forward.1} parent=11 // pred_check
        %p222 = pneg %p166
      $region34: #{scse_forward.1} parent=11 // pred_check_branch
        %224 = sbr.rel (%p222) target = $region36
      $region35: #{scse_forward.1} parent=11 // pred_region
        _
      $region36: #{scse_forward.1} parent=11 // pred_fallthru
        _
    $region12: #{scse_forward.1} parent=5 // pred_fallthru
      _
    %p225 = scmp.lt.s32.totalorder %s14, 2
    // Predicated region
    $region37: #{scse_forward.1} parent=5 // pred_check
      %p226 = pneg %p225
    $region38: #{scse_forward.1} parent=5 // pred_check_branch
      %228 = sbr.rel (%p226) target = $region40
    $region39: #{scse_forward.1} parent=5 // pred_region
      // Predicated region
      $region41: #{scse_forward.1} parent=39 // pred_check
        %p229 = pneg %p34
      $region42: #{scse_forward.1} parent=39 // pred_check_branch
        %231 = sbr.rel (%p229) target = $region44
      $region43: #{scse_forward.1} parent=39 // pred_region
        %p232 = scmp.lt.s32.totalorder %s14, 1
        %s233 = scalar_select %p232, %s14, 1
        %s234 = smul.addr %s233, 8
        %s235 = smul.addr %s234, 8
        %s236 = scalar_lea.vmem %s0, %s235
      $region44: #{scse_forward.1} parent=39 // pred_fallthru
        _
    $region40: #{scse_forward.1} parent=5 // pred_fallthru
      _
    %p237 = scmp.le.s32.totalorder 1, %s14
    %p238 = scmp.lt.s32.totalorder %s14, 3
    %p239 = pnand %p237, %p238
    %p240 = pneg %p239
    // Predicated region
    $region45: #{scse_forward.1} parent=5 // pred_check
      _
    $region46: #{scse_forward.1} parent=5 // pred_check_branch
      %242 = sbr.rel (%p239) target = $region48
    $region47: #{scse_forward.1} parent=5 // pred_region
      %s243 = ssub.s32 %s14, 1
      %p244 = scmp.lt.s32.totalorder %s19, 1
      %s245 = scalar_select %p244, %s19, 1
      %s246 = smul.addr %s245, 8
      %s247 = smul.addr %s246, 8
      %s248 = scalar_lea.vmem %s0, %s247
      %p249 = pneg %p40
      %p250 = pneg %p37
      %p251 = pneg %p61
      %p252 = pneg %p58
      %p253 = pneg %p82
      %p254 = pneg %p79
      %p255 = pneg %p103
      %p256 = pneg %p100
      %p257 = pneg %p124
      %p258 = pneg %p121
      %p259 = pneg %p145
      %p260 = pneg %p142
      %p261 = pneg %p166
      %p262 = pneg %p163
      %p263 = pneg %p192
      %p264 = pneg %p189
      %p265 = scmp.lt.s32.totalorder %s19, 1
      %s266 = scalar_select %p265, %s19, 1
      %s267 = smul.addr %s266, 8
      %s268 = smul.addr %s267, 8
      %s269 = scalar_lea.vmem %s7, %s268
      %p270 = scmp.lt.s32.totalorder %s19, 1
      %s271 = scalar_select %p270, %s19, 1
      %s272 = smul.addr %s271, 8
      %s273 = smul.addr %s272, 8
      %s274 = scalar_lea.vmem %s0, %s273
      %p275 = scmp.lt.s32.totalorder %s19, 1
      %s276 = scalar_select %p275, %s19, 1
      %s277 = smul.addr %s276, 8
      %s278 = smul.addr %s277, 8
      %s279 = scalar_lea.vmem %s7, %s278
      %v280 = vld [vmem:[%s274] sm:$0xff]
      %v281 = vld [vmem:[%s274 + $0x8] sm:$0xff]
      %v282 = vld [vmem:[%s274 + $0x10] sm:$0xff]
      %v283 = vld [vmem:[%s274 + $0x18] sm:$0xff]
      %v284 = vld [vmem:[%s274 + $0x20] sm:$0xff]
      %v285 = vld [vmem:[%s274 + $0x28] sm:$0xff]
      %v286 = vld [vmem:[%s274 + $0x30] sm:$0xff]
      %v287 = vld [vmem:[%s274 + $0x38] sm:$0xff]
      %v288 = vadd.f32 %v280, %v281
      %289 = vadd.xlane.f32.xlu0 %v288
      %v290 = vpop.xlane.xlu0 %289
      %v291 = vadd.f32 %v282, %v283
      %292 = vadd.xlane.f32.xlu0 %v291
      %v293 = vpop.xlane.xlu0 %292
      %v294 = vadd.f32 %v284, %v285
      %295 = vadd.xlane.f32.xlu0 %v294
      %v296 = vpop.xlane.xlu0 %295
      %v297 = vadd.f32 %v286, %v287
      %298 = vadd.xlane.f32.xlu0 %v297
      %v299 = vpop.xlane.xlu0 %298
      %v300 = vmul.f32 %v290, 0.00390625
      %v301 = vmul.f32 %v293, 0.00390625
      %v302 = vmul.f32 %v296, 0.00390625
      %v303 = vmul.f32 %v299, 0.00390625
      %v304 = vld [vmem:[%s1] sm:$0xff]
      %v305 = vld [vmem:[%s1 + $0x8] sm:$0xff]
      %v306 = vld [vmem:[%s1 + $0x10] sm:$0xff]
      %v307 = vld [vmem:[%s1 + $0x18] sm:$0xff]
      %v308 = vld [vmem:[%s2] sm:$0x1]
      %v313 = vlaneseq
      %v314 = vand.u32 %v313, 127
      %v315 = vlaneseq
      %v316 = vshrl.u32 %v315, 7
      %v317 = vsub.s32 %v314, %v316
      %v318 = vrot.slane %v300, %v317
      %v319 = vadd.s32 %v314, 4294967288
      %v320 = vlaneseq
      %v321 = vshrl.u32 %v320, 7
      %v322 = vsub.s32 %v319, %v321
      %v323 = vrot.slane %v301, %v322
      %vm324 = vcmask 130112
      %v325 = vsel %vm324, %v323, %v318
      %v326 = vadd.s32 %v314, 4294967280
      %v327 = vlaneseq
      %v328 = vshrl.u32 %v327, 7
      %v329 = vsub.s32 %v326, %v328
      %v330 = vrot.slane %v302, %v329
      %vm331 = vcmask 195712
      %v332 = vsel %vm331, %v330, %v325
      %v333 = vadd.s32 %v314, 4294967272
      %v334 = vlaneseq
      %v335 = vshrl.u32 %v334, 7
      %v336 = vsub.s32 %v333, %v335
      %v337 = vrot.slane %v303, %v336
      %vm338 = vcmask 261312
      %v339 = vsel %vm338, %v337, %v332
      %vm340 = vcmask 261120
      %v341 = vsel %vm340, %v339, 0
      %343 = vmatprep.subr.mxu0 0.0
      %344 = vmatpush1.msra.mxu0 %v304
      %345 = vmatprep.subr.mxu0 0.0
      %346 = vmatpush1.msra.mxu0 %v305
      %347 = vmatprep.subr.mxu0 0.0
      %348 = vmatpush1.msra.mxu0 %v306
      %349 = vmatprep.subr.mxu0 0.0
      %350 = vmatpush1.msra.mxu0 %v307
      %351 = vmatprep.subr.mxu0 0.0
      %352 = vmatpush1.msra.mxu0 0.0
      %353 = vmatprep.subr.mxu0 0.0
      %354 = vmatpush1.msra.mxu0 0.0
      %355 = vmatprep.subr.mxu0 0.0
      %356 = vmatpush1.msra.mxu0 0.0
      %357 = vmatprep.subr.mxu0 0.0
      %358 = vmatpush1.msra.mxu0 0.0
      %359 = vmatprep.subr.mxu0 0.0
      %360 = vmatpush1.msra.mxu0 0.0
      %361 = vmatprep.subr.mxu0 0.0
      %362 = vmatpush1.msra.mxu0 0.0
      %363 = vmatprep.subr.mxu0 0.0
      %364 = vmatpush1.msra.mxu0 0.0
      %365 = vmatprep.subr.mxu0 0.0
      %366 = vmatpush1.msra.mxu0 0.0
      %367 = vmatprep.subr.mxu0 0.0
      %368 = vmatpush1.msra.mxu0 0.0
      %369 = vmatprep.subr.mxu0 0.0
      %370 = vmatpush1.msra.mxu0 0.0
      %371 = vmatprep.subr.mxu0 0.0
      %372 = vmatpush1.msra.mxu0 0.0
      %373 = vmatprep.subr.mxu0 0.0
      %374 = vmatpush1.msra.mxu0 0.0
      %375 = vmatprep.subr.mxu0 0.0
      %376 = vmatpush1.msra.mxu0 0.0
      %377 = vmatprep.subr.mxu0 0.0
      %378 = vmatpush1.msra.mxu0 0.0
      %379 = vmatprep.subr.mxu0 0.0
      %380 = vmatpush1.msra.mxu0 0.0
      %381 = vmatprep.subr.mxu0 0.0
      %382 = vmatpush1.msra.mxu0 0.0
      %383 = vmatprep.subr.mxu0 0.0
      %384 = vmatpush1.msra.mxu0 0.0
      %385 = vmatprep.subr.mxu0 0.0
      %386 = vmatpush1.msra.mxu0 0.0
      %387 = vmatprep.subr.mxu0 0.0
      %388 = vmatpush1.msra.mxu0 0.0
      %389 = vmatprep.subr.mxu0 0.0
      %390 = vmatpush1.msra.mxu0 0.0
      %391 = vmatprep.subr.mxu0 0.0
      %392 = vmatpush1.msra.mxu0 0.0
      %393 = vmatprep.subr.mxu0 0.0
      %394 = vmatpush1.msra.mxu0 0.0
      %395 = vmatprep.subr.mxu0 0.0
      %396 = vmatpush1.msra.mxu0 0.0
      %397 = vmatprep.subr.mxu0 0.0
      %398 = vmatpush1.msra.mxu0 0.0
      %399 = vmatprep.subr.mxu0 0.0
      %400 = vmatpush1.msra.mxu0 0.0
      %401 = vmatprep.subr.mxu0 0.0
      %402 = vmatpush1.msra.mxu0 0.0
      %403 = vmatprep.subr.mxu0 0.0
      %404 = vmatpush1.msra.mxu0 0.0
      %405 = vmatprep.subr.mxu0 0.0
      %406 = vmatpush1.msra.mxu0 0.0
      %407 = vmatprep.mubr.f32.mxu0 0.0
      %408 = vmatmul.mubr.f32.gmra.mrb[0].mxu0 %v341
      %v409 = vpop.f32.mrb[0].mxu0
      %v410 = vadd.f32 %v308, %v409
      %v411 = vpop.f32.mrb[0].mxu0
      %412 = vdwg.mxu0
      %v413 = vmax.f32 %v410, 0.0
      %v414 = vld [vmem:[%s3] sm:$0x3]
      %v415 = vld [vmem:[%s4] sm:$0x1]
      %vm416 = vcmask 15360
      %v418 = vsel %vm416, %v413, 0
      %vm420 = vcmask 1041408
      %v422 = vsel %vm420, %v414, 0
      %424 = vmatprep.subr.mxu0 0.0
      %425 = vmatpush1.msra.mxu0 %v422
      %426 = vmatprep.subr.mxu0 0.0
      %427 = vmatpush1.msra.mxu0 0.0
      %428 = vmatprep.subr.mxu0 0.0
      %429 = vmatpush1.msra.mxu0 0.0
      %430 = vmatprep.subr.mxu0 0.0
      %431 = vmatpush1.msra.mxu0 0.0
      %432 = vmatprep.subr.mxu0 0.0
      %433 = vmatpush1.msra.mxu0 0.0
      %434 = vmatprep.subr.mxu0 0.0
      %435 = vmatpush1.msra.mxu0 0.0
      %436 = vmatprep.subr.mxu0 0.0
      %437 = vmatpush1.msra.mxu0 0.0
      %438 = vmatprep.subr.mxu0 0.0
      %439 = vmatpush1.msra.mxu0 0.0
      %440 = vmatprep.subr.mxu0 0.0
      %441 = vmatpush1.msra.mxu0 0.0
      %442 = vmatprep.subr.mxu0 0.0
      %443 = vmatpush1.msra.mxu0 0.0
      %444 = vmatprep.subr.mxu0 0.0
      %445 = vmatpush1.msra.mxu0 0.0
      %446 = vmatprep.subr.mxu0 0.0
      %447 = vmatpush1.msra.mxu0 0.0
      %448 = vmatprep.subr.mxu0 0.0
      %449 = vmatpush1.msra.mxu0 0.0
      %450 = vmatprep.subr.mxu0 0.0
      %451 = vmatpush1.msra.mxu0 0.0
      %452 = vmatprep.subr.mxu0 0.0
      %453 = vmatpush1.msra.mxu0 0.0
      %454 = vmatprep.subr.mxu0 0.0
      %455 = vmatpush1.msra.mxu0 0.0
      %456 = vmatprep.subr.mxu0 0.0
      %457 = vmatpush1.msra.mxu0 0.0
      %458 = vmatprep.subr.mxu0 0.0
      %459 = vmatpush1.msra.mxu0 0.0
      %460 = vmatprep.subr.mxu0 0.0
      %461 = vmatpush1.msra.mxu0 0.0
      %462 = vmatprep.subr.mxu0 0.0
      %463 = vmatpush1.msra.mxu0 0.0
      %464 = vmatprep.subr.mxu0 0.0
      %465 = vmatpush1.msra.mxu0 0.0
      %466 = vmatprep.subr.mxu0 0.0
      %467 = vmatpush1.msra.mxu0 0.0
      %468 = vmatprep.subr.mxu0 0.0
      %469 = vmatpush1.msra.mxu0 0.0
      %470 = vmatprep.subr.mxu0 0.0
      %471 = vmatpush1.msra.mxu0 0.0
      %472 = vmatprep.subr.mxu0 0.0
      %473 = vmatpush1.msra.mxu0 0.0
      %474 = vmatprep.subr.mxu0 0.0
      %475 = vmatpush1.msra.mxu0 0.0
      %476 = vmatprep.subr.mxu0 0.0
      %477 = vmatpush1.msra.mxu0 0.0
      %478 = vmatprep.subr.mxu0 0.0
      %479 = vmatpush1.msra.mxu0 0.0
      %480 = vmatprep.subr.mxu0 0.0
      %481 = vmatpush1.msra.mxu0 0.0
      %482 = vmatprep.subr.mxu0 0.0
      %483 = vmatpush1.msra.mxu0 0.0
      %484 = vmatprep.subr.mxu0 0.0
      %485 = vmatpush1.msra.mxu0 0.0
      %486 = vmatprep.subr.mxu0 0.0
      %487 = vmatpush1.msra.mxu0 0.0
      %488 = vmatprep.mubr.f32.mxu0 0.0
      %489 = vmatmul.mubr.f32.gmra.mrb[0].mxu0 %v418
      %v490 = vpop.f32.mrb[0].mxu0
      %v491 = vadd.f32 %v415, %v490
      %v492 = vpop.f32.mrb[0].mxu0
      %493 = vdwg.mxu0
      %v494 = vxor.u32 %v491, 2147483648
      %v495 = vmul.f32 %v494, 1.442695
      %v496 = vpow.pop %v495
      %v497 = vadd.f32 %v496, 1.0
      %v498 = vrcp.pop %v497
      %v499 = vmul.f32 1.0, %v498
      %v500 = vld [vmem:[%s5] sm:$0x1]
      %v501 = vlaneseq
      %v502 = vshrl.u32 %v501, 7
      %v503 = vsub.s32 0, %v502
      %v504 = vrot.slane %v500, %v503
      %506 = vbcast.lane.b32.xlu0 %v504, 256
      %v507 = vpop.permute.xlu0 %506
      %s509 = sor.u32 256, 8
      %510 = vbcast.lane.b32.xlu0 %v504, %s509
      %v511 = vpop.permute.xlu0 %510
      %s513 = sor.u32 256, 16
      %514 = vbcast.lane.b32.xlu0 %v504, %s513
      %v515 = vpop.permute.xlu0 %514
      %s517 = sor.u32 256, 24
      %518 = vbcast.lane.b32.xlu0 %v504, %s517
      %v519 = vpop.permute.xlu0 %518
      %v520 = vmul.f32 %v280, %v507
      %v521 = vmul.f32 %v281, %v507
      %v522 = vmul.f32 %v282, %v511
      %v523 = vmul.f32 %v283, %v511
      %v524 = vmul.f32 %v284, %v515
      %v525 = vmul.f32 %v285, %v515
      %v526 = vmul.f32 %v286, %v519
      %v527 = vmul.f32 %v287, %v519
      %v528 = vadd.f32 %v520, %v522
      %v529 = vadd.f32 %v528, %v524
      %v530 = vadd.f32 %v529, %v526
      %v531 = vrot.slane %v530, 4
      %v532 = vadd.f32 %v530, %v531
      %v533 = vrot.slane %v532, 2
      %v534 = vadd.f32 %v532, %v533
      %v535 = vrot.slane %v534, 1
      %v536 = vadd.f32 %v534, %v535
      %v537 = vadd.f32 %v521, %v523
      %v538 = vadd.f32 %v537, %v525
      %v539 = vadd.f32 %v538, %v527
      %v540 = vrot.slane %v539, 4
      %v541 = vadd.f32 %v539, %v540
      %v542 = vrot.slane %v541, 2
      %v543 = vadd.f32 %v541, %v542
      %v544 = vrot.slane %v543, 1
      %v545 = vadd.f32 %v543, %v544
      %s546 = sld [smem:[#allocation2]]
      %v547 = vstv %s546
      %v548 = vadd.f32 %v536, %v547
      %v549 = vadd.f32 %v545, %v547
      %v550 = vxor.u32 %v548, 2147483648
      %v551 = vxor.u32 %v549, 2147483648
      %v552 = vmul.f32 %v550, 1.442695
      %v553 = vpow.pop %v552
      %v554 = vmul.f32 %v551, 1.442695
      %v555 = vpow.pop %v554
      %v556 = vadd.f32 %v553, 1.0
      %v557 = vadd.f32 %v555, 1.0
      %v558 = vrcp.pop %v556
      %v559 = vmul.f32 1.0, %v558
      %v560 = vrcp.pop %v557
      %v561 = vmul.f32 1.0, %v560
      %v562 = vlaneseq
      %v563 = vshrl.u32 %v562, 7
      %v564 = vsub.s32 0, %v563
      %v565 = vrot.slane %v499, %v564
      %567 = vbcast.lane.b32.xlu0 %v565, 256
      %v568 = vpop.permute.xlu0 %567
      %s570 = sor.u32 256, 8
      %571 = vbcast.lane.b32.xlu0 %v565, %s570
      %v572 = vpop.permute.xlu0 %571
      %s574 = sor.u32 256, 16
      %575 = vbcast.lane.b32.xlu0 %v565, %s574
      %v576 = vpop.permute.xlu0 %575
      %s578 = sor.u32 256, 24
      %579 = vbcast.lane.b32.xlu0 %v565, %s578
      %v580 = vpop.permute.xlu0 %579
      %v581 = vadd.f32 %v568, %v559
      %v582 = vadd.f32 %v568, %v561
      %v583 = vadd.f32 %v572, %v559
      %v584 = vadd.f32 %v572, %v561
      %v585 = vadd.f32 %v576, %v559
      %v586 = vadd.f32 %v576, %v561
      %v587 = vadd.f32 %v580, %v559
      %v588 = vadd.f32 %v580, %v561
      %v589 = vmul.f32 %v280, %v581
      %v590 = vmul.f32 %v281, %v582
      %v591 = vmul.f32 %v282, %v583
      %v592 = vmul.f32 %v283, %v584
      %v593 = vmul.f32 %v284, %v585
      %v594 = vmul.f32 %v285, %v586
      %v595 = vmul.f32 %v286, %v587
      %v596 = vmul.f32 %v287, %v588
      %597 = vst [vmem:[%s279] sm:$0xff] %v589
      %598 = vst [vmem:[%s279 + $0x8] sm:$0xff] %v590
      %599 = vst [vmem:[%s279 + $0x10] sm:$0xff] %v591
      %600 = vst [vmem:[%s279 + $0x18] sm:$0xff] %v592
      %601 = vst [vmem:[%s279 + $0x20] sm:$0xff] %v593
      %602 = vst [vmem:[%s279 + $0x28] sm:$0xff] %v594
      %603 = vst [vmem:[%s279 + $0x30] sm:$0xff] %v595
      %604 = vst [vmem:[%s279 + $0x38] sm:$0xff] %v596
      %p605 = scmp.lt.s32.totalorder %s19, 1
      %s606 = scalar_select %p605, %s19, 1
      %s607 = smul.addr %s606, 8
      %s608 = smul.addr %s607, 8
      %s609 = scalar_lea.vmem %s7, %s608
      // Predicated region
      $region49: #{scse_forward.1} parent=47 // pred_check
        %p610 = pneg %p189
      $region50: #{scse_forward.1} parent=47 // pred_check_branch
        %612 = sbr.rel (%p610) target = $region52
      $region51: #{scse_forward.1} parent=47 // pred_region
        _
      $region52: #{scse_forward.1} parent=47 // pred_fallthru
        _
    $region48: #{scse_forward.1} parent=5 // pred_fallthru
      _
    %p613 = scmp.le.s32.totalorder 2, %s14
    // Predicated region
    $region53: #{scse_forward.1} parent=5 // pred_check
      %p614 = pneg %p613
    $region54: #{scse_forward.1} parent=5 // pred_check_branch
      %616 = sbr.rel (%p614) target = $region56
    $region55: #{scse_forward.1} parent=5 // pred_region
      %s617 = ssub.s32 %s14, 2
      // Predicated region
      $region57: #{scse_forward.1} parent=55 // pred_check
        %p618 = pneg %p195
      $region58: #{scse_forward.1} parent=55 // pred_check_branch
        %620 = sbr.rel (%p618) target = $region60
      $region59: #{scse_forward.1} parent=55 // pred_region
        %p621 = scmp.lt.s32.totalorder %s20, 1
        %s622 = scalar_select %p621, %s20, 1
        %s623 = smul.addr %s622, 8
        %s624 = smul.addr %s623, 8
        %s625 = scalar_lea.vmem %s7, %s624
      $region60: #{scse_forward.1} parent=55 // pred_fallthru
        _
    $region56: #{scse_forward.1} parent=5 // pred_fallthru
      _
  $region6: #{scse_forward.1} parent=0 // loop_footer
    %s18 = sadd.s32 1, %s14
  $region7: #{scse_forward.1} parent=0 // loop_footer_branch
    %13 = sbr.rel target = $region3
  $region8: #{scse_forward.1} parent=0 // loop_exit
    _

</llo_original>
